<compile_context>
chip_gen: v6e
topology: v6e:2x2x1
jax: 0.10.0
libtpu: 0.0.40
codegen_flags: <defaults>
</compile_context>

<pallas_src>
import math
import jax
import jax.numpy as jnp
from jax.experimental import pallas as pl
from jax.experimental.pallas import tpu as pltpu


def _round_up(x, m):
    return ((x + m - 1) // m) * m


_VMEM_LIMIT = 48 * 1024 * 1024          # scoped VMEM requested from Mosaic
_FUSED_VMEM_BUDGET = 40 * 1024 * 1024   # max estimated residency for fused path


# ---------------------------------------------------------------------------
# Fused path: out[b, :, e_tile] = adj[b] @ (x[b] @ W[:, e_tile]) + bias[e_tile]
# grid = (B, Ep/TE, Lp/TL); support tile accumulated in VMEM scratch over L.
# ---------------------------------------------------------------------------
def _fused_kernel(x_ref, w_ref, adj_ref, bias_ref, o_ref, sup_ref):
    l = pl.program_id(2)

    @pl.when(l == 0)
    def _():
        sup_ref[...] = jnp.zeros_like(sup_ref)

    sup_ref[...] += jnp.dot(x_ref[0], w_ref[...],
                            preferred_element_type=jnp.float32)

    @pl.when(l == pl.num_programs(2) - 1)
    def _():
        agg = jnp.dot(adj_ref[0], sup_ref[...],
                      preferred_element_type=jnp.float32)
        o_ref[0] = (agg + bias_ref[...]).astype(o_ref.dtype)


def _fused_gcn(x_p, w_p, adj_p, bias2d, *, te, tl):
    B, Sp, Lp = x_p.shape
    Ep = w_p.shape[1]
    flops = 2 * B * Sp * Lp * Ep + 2 * B * Sp * Sp * Ep
    bytes_accessed = 4 * (B * Sp * Lp * max(1, Ep // te) + Lp * Ep
                          + B * Sp * Sp + Ep + B * Sp * Ep)
    return pl.pallas_call(
        _fused_kernel,
        out_shape=jax.ShapeDtypeStruct((B, Sp, Ep), x_p.dtype),
        grid_spec=pltpu.PrefetchScalarGridSpec(
            num_scalar_prefetch=0,
            grid=(B, Ep // te, Lp // tl),
            in_specs=[
                pl.BlockSpec((1, Sp, tl), lambda b, e, l: (b, 0, l)),
                pl.BlockSpec((tl, te), lambda b, e, l: (l, e)),
                pl.BlockSpec((1, Sp, Sp), lambda b, e, l: (b, 0, 0)),
                pl.BlockSpec((1, te), lambda b, e, l: (0, e)),
            ],
            out_specs=pl.BlockSpec((1, Sp, te), lambda b, e, l: (b, 0, e)),
            scratch_shapes=[pltpu.VMEM((Sp, te), jnp.float32)],
        ),
        compiler_params=pltpu.CompilerParams(
            dimension_semantics=("parallel", "parallel", "arbitrary"),
            vmem_limit_bytes=_VMEM_LIMIT,
        ),
        cost_estimate=pl.CostEstimate(
            flops=flops, transcendentals=0, bytes_accessed=bytes_accessed),
    )(x_p, w_p, adj_p, bias2d)


# ---------------------------------------------------------------------------
# Fallback stage 1: support_flat = (B*Sp, Lp) @ (Lp, Ep)   (tiled, f32 acc)
# ---------------------------------------------------------------------------
def _matmul_kernel(x_ref, w_ref, o_ref, acc_ref):
    @pl.when(pl.program_id(2) == 0)
    def _():
        acc_ref[...] = jnp.zeros_like(acc_ref)

    acc_ref[...] += jnp.dot(x_ref[...], w_ref[...],
                            preferred_element_type=jnp.float32)

    @pl.when(pl.program_id(2) == pl.num_programs(2) - 1)
    def _():
        o_ref[...] = acc_ref[...].astype(o_ref.dtype)


def _support_matmul(x_flat, w, *, tm, tn, tk):
    M, K = x_flat.shape
    N = w.shape[1]
    flops = 2 * M * K * N
    bytes_accessed = 4 * (M * K + K * N + M * N)
    return pl.pallas_call(
        _matmul_kernel,
        out_shape=jax.ShapeDtypeStruct((M, N), x_flat.dtype),
        grid_spec=pltpu.PrefetchScalarGridSpec(
            num_scalar_prefetch=0,
            grid=(M // tm, N // tn, K // tk),
            in_specs=[
                pl.BlockSpec((tm, tk), lambda i, j, k: (i, k)),
                pl.BlockSpec((tk, tn), lambda i, j, k: (k, j)),
            ],
            out_specs=pl.BlockSpec((tm, tn), lambda i, j, k: (i, j)),
            scratch_shapes=[pltpu.VMEM((tm, tn), jnp.float32)],
        ),
        compiler_params=pltpu.CompilerParams(
            dimension_semantics=("parallel", "parallel", "arbitrary"),
            vmem_limit_bytes=_VMEM_LIMIT,
        ),
        cost_estimate=pl.CostEstimate(
            flops=flops, transcendentals=0, bytes_accessed=bytes_accessed),
    )(x_flat, w)


# ---------------------------------------------------------------------------
# Fallback stage 2: out[b] = adj[b] @ support[b] + bias (node dim tiled q x k)
# ---------------------------------------------------------------------------
def _aggregate_kernel(adj_ref, sup_ref, bias_ref, o_ref, acc_ref):
    @pl.when(pl.program_id(3) == 0)
    def _():
        acc_ref[...] = jnp.zeros_like(acc_ref)

    acc_ref[...] += jnp.dot(adj_ref[0], sup_ref[0],
                            preferred_element_type=jnp.float32)

    @pl.when(pl.program_id(3) == pl.num_programs(3) - 1)
    def _():
        o_ref[0] = (acc_ref[...] + bias_ref[...]).astype(o_ref.dtype)


def _aggregate(adj, support, bias2d, *, ts, te):
    B, Sp, _ = adj.shape
    Ep = support.shape[2]
    flops = 2 * B * Sp * Sp * Ep
    bytes_accessed = 4 * (B * Sp * Sp + 2 * B * Sp * Ep + Ep)
    return pl.pallas_call(
        _aggregate_kernel,
        out_shape=jax.ShapeDtypeStruct((B, Sp, Ep), support.dtype),
        grid_spec=pltpu.PrefetchScalarGridSpec(
            num_scalar_prefetch=0,
            grid=(B, Sp // ts, Ep // te, Sp // ts),
            in_specs=[
                pl.BlockSpec((1, ts, ts), lambda b, q, e, k: (b, q, k)),
                pl.BlockSpec((1, ts, te), lambda b, q, e, k: (b, k, e)),
                pl.BlockSpec((1, te), lambda b, q, e, k: (0, e)),
            ],
            out_specs=pl.BlockSpec((1, ts, te), lambda b, q, e, k: (b, q, e)),
            scratch_shapes=[pltpu.VMEM((ts, te), jnp.float32)],
        ),
        compiler_params=pltpu.CompilerParams(
            dimension_semantics=("parallel", "parallel", "parallel",
                                 "arbitrary"),
            vmem_limit_bytes=_VMEM_LIMIT,
        ),
        cost_estimate=pl.CostEstimate(
            flops=flops, transcendentals=0, bytes_accessed=bytes_accessed),
    )(adj, support, bias2d)


def graph_convolution(inputs, adj, weight, bias=None, *, force_two_stage=False):
    """inputs: (B,S,L), adj: (B,S,S), weight: (L,E), bias: (E,) -> (B,S,E)."""
    B, S, L = inputs.shape
    E = weight.shape[1]
    if bias is None:
        bias = jnp.zeros((E,), weight.dtype)

    # Lane dims padded to multiples of 128 (unmasked stores, full MXU passes).
    Sp = _round_up(S, 128)
    te = min(_round_up(E, 128), 256)     # output-feature tile
    tl = min(_round_up(L, 128), 512)     # input-feature (reduction) tile
    Ep = _round_up(E, te)
    Lp = _round_up(L, tl)

    # Zero-pad to tile multiples (zeros do not change the matmul results).
    x_p = jnp.pad(inputs, ((0, 0), (0, Sp - S), (0, Lp - L)))
    adj_p = jnp.pad(adj, ((0, 0), (0, Sp - S), (0, Sp - S)))
    w_p = jnp.pad(weight, ((0, Lp - L), (0, Ep - E)))
    b_p = jnp.pad(bias, (0, Ep - E)).reshape(1, Ep)

    # Estimated fused-kernel VMEM residency: double-buffered blocks + scratch.
    fused_bytes = 4 * (2 * (Sp * Sp + Sp * tl + tl * te + te + Sp * te)
                       + Sp * te)

    if fused_bytes <= _FUSED_VMEM_BUDGET and not force_two_stage:
        # Single fused pallas_call: support never touches HBM.
        out_p = _fused_gcn(x_p, w_p, adj_p, b_p, te=te, tl=tl)
    else:
        # Two-stage fallback for very large node counts.
        ts = 256 if Sp % 256 == 0 else 128
        Mp = B * Sp
        tm = 256 if Mp % 256 == 0 else 128
        support = _support_matmul(x_p.reshape(Mp, Lp), w_p,
                                  tm=tm, tn=te, tk=tl)
        support = support.reshape(B, Sp, Ep)
        out_p = _aggregate(adj_p, support, b_p, ts=ts, te=te)

    return out_p[:, :S, :E]


if __name__ == "__main__":
    # Small shapes consistent with the module's forward.
    B, S = 2, 8            # batch, number of nodes / sequence length
    in_features = 32
    out_features = 32

    key = jax.random.PRNGKey(0)
    k_x, k_adj, k_w, k_b = jax.random.split(key, 4)

    # Deterministic parameter init mirroring reset_parameters():
    # uniform(-stdv, stdv) with stdv = 1/sqrt(out_features).
    stdv = 1.0 / math.sqrt(out_features)
    weight = jax.random.uniform(
        k_w, (in_features, out_features), jnp.float32, -stdv, stdv)
    bias = jax.random.uniform(
        k_b, (out_features,), jnp.float32, -stdv, stdv)

    inputs = jax.random.normal(k_x, (B, S, in_features), jnp.float32)
    adj = jax.random.normal(k_adj, (B, S, S), jnp.float32)

    # Reference in plain JAX (same semantics as the torch einsums).
    support_ref = jnp.einsum('bsl,le->bse', inputs, weight,
                             precision=jax.lax.Precision.HIGHEST)
    out_ref = jnp.einsum('bsl,ble->bse', adj, support_ref,
                         precision=jax.lax.Precision.HIGHEST) + bias

    # Fused path (default for these sizes).
    out_fused = jax.block_until_ready(
        graph_convolution(inputs, adj, weight, bias))
    assert out_fused.shape == (B, S, out_features)
    assert jnp.allclose(out_fused, out_ref, atol=1e-4, rtol=1e-4), \
        float(jnp.max(jnp.abs(out_fused - out_ref)))

    # Two-stage fallback path (exercised explicitly for coverage).
    out_2s = jax.block_until_ready(
        graph_convolution(inputs, adj, weight, bias, force_two_stage=True))
    assert jnp.allclose(out_2s, out_ref, atol=1e-4, rtol=1e-4), \
        float(jnp.max(jnp.abs(out_2s - out_ref)))

    print("KERNEL_OK")
</pallas_src>

<mosaic_0001>
module attributes {stable_mosaic.version = 11 : i64} {
  func.func @_fused_kernel(%arg0: i32, %arg1: i32, %arg2: i32, %arg3: memref<1x128x128xf32, #tpu.memory_space<vmem>>, %arg4: memref<128x128xf32, #tpu.memory_space<vmem>>, %arg5: memref<1x128x128xf32, #tpu.memory_space<vmem>>, %arg6: memref<1x128xf32, #tpu.memory_space<vmem>>, %arg7: memref<1x128x128xf32, #tpu.memory_space<vmem>>, %arg8: memref<128x128xf32, #tpu.memory_space<vmem>>) attributes {dimension_semantics = [#tpu.dimension_semantics<parallel>, #tpu.dimension_semantics<parallel>, #tpu.dimension_semantics<arbitrary>], iteration_bounds = array<i64: 2, 1, 1>, scalar_prefetch = 0 : i64, scratch_operands = 1 : i64, tpu.core_type = #tpu.core_type<tc>, window_params = [{transform_indices = @transform_0, window_bounds = array<i64: 1, 128, 128>}, {transform_indices = @transform_1, window_bounds = array<i64: 128, 128>}, {transform_indices = @transform_2, window_bounds = array<i64: 1, 128, 128>}, {transform_indices = @transform_3, window_bounds = array<i64: 1, 128>}, {transform_indices = @transform_4, window_bounds = array<i64: 1, 128, 128>}]} {
    %c0_i32 = arith.constant 0 : i32
    %0 = arith.cmpi eq, %arg2, %c0_i32 : i32
    %1 = arith.extui %0 : i1 to i32
    %c0_i32_0 = arith.constant 0 : i32
    %2 = arith.cmpi ne, %1, %c0_i32_0 : i32
    scf.if %2 {
      %cst_11 = arith.constant 0.000000e+00 : f32
      %13 = vector.broadcast %cst_11 : f32 to vector<128x128xf32>
      %c0_12 = arith.constant 0 : index
      %c0_13 = arith.constant 0 : index
      %14 = vector.load %arg8[%c0_12, %c0_13] : memref<128x128xf32, #tpu.memory_space<vmem>>, vector<128x128xf32>
      tpu.vector_store %arg8[%c0_12, %c0_13], %13 {strides = array<i32>} : memref<128x128xf32, #tpu.memory_space<vmem>>, vector<128x128xf32>,
    } else {
    }
    %c0 = arith.constant 0 : index
    %c0_1 = arith.constant 0 : index
    %3 = vector.load %arg8[%c0, %c0_1] : memref<128x128xf32, #tpu.memory_space<vmem>>, vector<128x128xf32>
    %c0_2 = arith.constant 0 : index
    %c0_3 = arith.constant 0 : index
    %c0_4 = arith.constant 0 : index
    %4 = vector.load %arg3[%c0_2, %c0_3, %c0_4] : memref<1x128x128xf32, #tpu.memory_space<vmem>>, vector<1x128x128xf32>
    %5 = vector.shape_cast %4 : vector<1x128x128xf32> to vector<128x128xf32>
    %c0_5 = arith.constant 0 : index
    %c0_6 = arith.constant 0 : index
    %6 = vector.load %arg4[%c0_5, %c0_6] : memref<128x128xf32, #tpu.memory_space<vmem>>, vector<128x128xf32>
    %cst = arith.constant dense<0.000000e+00> : vector<128x128xf32>
    %7 = tpu.matmul %5, %6, %cst {dimension_numbers = #tpu.dot_dimension_numbers<[1], [0], [0], [1], [0, 0, 1, 1], [], []>} : vector<128x128xf32>, vector<128x128xf32>, vector<128x128xf32> -> vector<128x128xf32>
    %8 = arith.addf %3, %7 : vector<128x128xf32>
    %c0_7 = arith.constant 0 : index
    %c0_8 = arith.constant 0 : index
    %9 = vector.load %arg8[%c0_7, %c0_8] : memref<128x128xf32, #tpu.memory_space<vmem>>, vector<128x128xf32>
    tpu.vector_store %arg8[%c0_7, %c0_8], %8 {strides = array<i32>} : memref<128x128xf32, #tpu.memory_space<vmem>>, vector<128x128xf32>,
    %c0_i32_9 = arith.constant 0 : i32
    %10 = arith.cmpi eq, %arg2, %c0_i32_9 : i32
    %11 = arith.extui %10 : i1 to i32
    %c0_i32_10 = arith.constant 0 : i32
    %12 = arith.cmpi ne, %11, %c0_i32_10 : i32
    scf.if %12 {
      %c0_11 = arith.constant 0 : index
      %c0_12 = arith.constant 0 : index
      %c0_13 = arith.constant 0 : index
      %13 = vector.load %arg5[%c0_11, %c0_12, %c0_13] : memref<1x128x128xf32, #tpu.memory_space<vmem>>, vector<1x128x128xf32>
      %14 = vector.shape_cast %13 : vector<1x128x128xf32> to vector<128x128xf32>
      %c0_14 = arith.constant 0 : index
      %c0_15 = arith.constant 0 : index
      %15 = vector.load %arg8[%c0_14, %c0_15] : memref<128x128xf32, #tpu.memory_space<vmem>>, vector<128x128xf32>
      %cst_16 = arith.constant dense<0.000000e+00> : vector<128x128xf32>
      %16 = tpu.matmul %14, %15, %cst_16 {dimension_numbers = #tpu.dot_dimension_numbers<[1], [0], [0], [1], [0, 0, 1, 1], [], []>} : vector<128x128xf32>, vector<128x128xf32>, vector<128x128xf32> -> vector<128x128xf32>
      %c0_17 = arith.constant 0 : index
      %c0_18 = arith.constant 0 : index
      %17 = vector.load %arg6[%c0_17, %c0_18] : memref<1x128xf32, #tpu.memory_space<vmem>>, vector<1x128xf32>
      %18 = vector.broadcast %17 : vector<1x128xf32> to vector<128x128xf32>
      %19 = arith.addf %16, %18 : vector<128x128xf32>
      %c0_19 = arith.constant 0 : index
      %c0_20 = arith.constant 0 : index
      %c0_21 = arith.constant 0 : index
      %20 = vector.load %arg7[%c0_19, %c0_20, %c0_21] : memref<1x128x128xf32, #tpu.memory_space<vmem>>, vector<1x128x128xf32>
      %21 = vector.shape_cast %20 : vector<1x128x128xf32> to vector<128x128xf32>
      %22 = vector.shape_cast %19 : vector<128x128xf32> to vector<1x128x128xf32>
      tpu.vector_store %arg7[%c0_19, %c0_20, %c0_21], %22 {strides = array<i32>} : memref<1x128x128xf32, #tpu.memory_space<vmem>>, vector<1x128x128xf32>,
    } else {
    }
    return
  }
  func.func @transform_0(%arg0: i32, %arg1: i32, %arg2: i32) -> (i32, i32, i32) {
    %c0_i32 = arith.constant 0 : i32
    %c0_i32_0 = arith.constant 0 : i32
    return %arg0, %c0_i32, %arg2 : i32, i32, i32
  }
  func.func @transform_1(%arg0: i32, %arg1: i32, %arg2: i32) -> (i32, i32) {
    %c0_i32 = arith.constant 0 : i32
    return %arg2, %arg1 : i32, i32
  }
  func.func @transform_2(%arg0: i32, %arg1: i32, %arg2: i32) -> (i32, i32, i32) {
    %c0_i32 = arith.constant 0 : i32
    %c0_i32_0 = arith.constant 0 : i32
    %c0_i32_1 = arith.constant 0 : i32
    return %arg0, %c0_i32, %c0_i32_0 : i32, i32, i32
  }
  func.func @transform_3(%arg0: i32, %arg1: i32, %arg2: i32) -> (i32, i32) {
    %c0_i32 = arith.constant 0 : i32
    %c0_i32_0 = arith.constant 0 : i32
    return %c0_i32, %arg1 : i32, i32
  }
  func.func @transform_4(%arg0: i32, %arg1: i32, %arg2: i32) -> (i32, i32, i32) {
    %c0_i32 = arith.constant 0 : i32
    %c0_i32_0 = arith.constant 0 : i32
    return %arg0, %c0_i32, %arg1 : i32, i32, i32
  }
}

</mosaic_0001>

<llo_original>
// kernel: tpu_custom_call.1
$region0: #{tpu_custom_call.1}
  #allocation0 [shape = 'u32[]', space=smem, size = 0x4, offset = 0x4, fixed_abs, tag = 'smem constant byte address 0x4 - core index']
  #allocation1 [shape = 'u32[144,128]{1,0:T(1,128)}', space=vmem, size = 0x12000, scoped, tag = 'internal scratch']
  #allocation2 [shape = 'f32[128,128]{1,0:T(8,128)}', space=vmem, size = 0x10000, scoped, tag = 'scratch operand']
  %s0 = inlined_call_operand.hbm [shape: f32[2,128,128], index: 0, kind: input, shape index: {}]
  %s1 = inlined_call_operand.hbm [shape: f32[128,128], index: 1, kind: input, shape index: {}]
  %s2 = inlined_call_operand.hbm [shape: f32[2,128,128], index: 2, kind: input, shape index: {}]
  %s3 = inlined_call_operand.vmem [shape: f32[1,128], index: 3, kind: input, shape index: {}]
  %s4 = inlined_call_operand.hbm [shape: f32[2,128,128], index: 4, kind: output, shape index: {}]
  %s5 = sld [smem:[#allocation0]]
  $region69: #{tpu_custom_call.1} parent=0
    _
  %s7 = ssub.s32 1, %s5
  %s8 = scalar_select 0, %s7, %s5
  $region1: #{tpu_custom_call.1} parent=0
    #allocation3 [shape = 'u8[131072]{0}', space=vmem, size = 0x20000, scoped, tag = 'input window, operand 0']
    #allocation4 [shape = 's32[2]{0}', space=sflag, size = 0x8, scoped, tag = 'scoped memory for tpu_custom_call.1']
    #allocation5 [shape = 's32[2]{0}', space=sflag, size = 0x8, scoped, tag = 'scoped memory for tpu_custom_call.1']
    #allocation6 [shape = 'u8[65536]{0}', space=vmem, size = 0x10000, scoped, tag = 'input window, operand 1, single buffered']
    #allocation7 [shape = 's32[1]{0}', space=sflag, size = 0x4, scoped, tag = 'scoped memory for tpu_custom_call.1']
    #allocation8 [shape = 'u8[131072]{0}', space=vmem, size = 0x20000, scoped, tag = 'input window, operand 2']
    #allocation9 [shape = 'u8[131072]{0}', space=vmem, size = 0x20000, scoped, tag = 'output window, operand 0']
    %9 = vsyncpa [#allocation4], 0
    %s10 = scalar_lea.sflag [#allocation4], 1
    %11 = vsyncpa %s10, 0
    %12 = vsyncpa [#allocation7], 0
    %13 = vsyncpa [#allocation5], 0
    %s14 = scalar_lea.sflag [#allocation5], 1
    %15 = vsyncpa %s14, 0
    loop: start=0, step=1, limit=4
    $region2: #{tpu_custom_call.1} parent=1 // loop_pre_header
      _
    $region3: #{tpu_custom_call.1} parent=1 // loop_header
      %s17 = sphi 0, %s21
      %p18 = scmp.ge.s32.totalorder %s17, 4
      %s24 = sphi 0, %s43
      %s25 = sphi 0, %s39
      %s26 = sphi 0, %s35
      %s27 = sphi 0, %s24
      %s28 = sphi 0, %s25
      %s29 = sphi 0, %s26
      %s30 = sphi 0, %s27
      %s31 = sphi 0, %s28
      %s32 = sphi 0, %s29
      %s48 = sphi 0, %s50
      %s51 = sphi 0, %s48
      %s52 = sphi 0, %s51
      %s68 = sphi 0, %s52
      %s76 = sphi 0, %s78
      %s79 = sphi 0, %s76
      %s80 = sphi 0, %s79
      %s96 = sphi 0, %s80
      %s102 = sphi 0, %s104
      %s105 = sphi 0, %s102
      %s106 = sphi 0, %s105
      %s122 = sphi 0, %s106
      %s128 = sphi 0, %s130
      %s131 = sphi 0, %s128
      %s132 = sphi 0, %s131
      %s148 = sphi 0, %s132
      %s156 = sphi 0, %s158
      %s159 = sphi 0, %s156
      %s160 = sphi 0, %s159
      %s176 = sphi 0, %s160
    $region4: #{tpu_custom_call.1} parent=1 // loop_header_branch
      %20 = sbr.rel (%p18) target = $region8
    $region5: #{tpu_custom_call.1} parent=1 // loop_body
      %s22 = ssub.s32 %s17, 1
      %s23 = ssub.s32 %s17, 2
      %s33 = sadd.s32 1, %s26
      %p34 = scmp.ge.s32.totalorder %s33, 1
      %s35 = scalar_select %p34, 0, %s33
      %s36 = sadd.s32 1, %s25
      %s37 = scalar_select %p34, %s36, %s25
      %p38 = scmp.ge.s32.totalorder %s37, 1
      %s39 = scalar_select %p38, 0, %s37
      %s40 = sadd.s32 1, %s24
      %s41 = scalar_select %p38, %s40, %s24
      %p42 = scmp.ge.s32.totalorder %s41, 2
      %s43 = scalar_select %p42, 0, %s41
      %s44 = ssub.s32 %s24, %s43
      %s45 = ssub.s32 %s26, %s35
      %s46 = sor.u32 %s44, %s45
      %p47 = scmp.eq.s32.totalorder %s46, 0
      %s49 = sadd.s32 %s48, 1
      %s50 = scalar_select %p47, %s48, %s49
      %p53 = pneg %p47
      %p54 = scmp.eq.s32.totalorder %s17, 1
      %p55 = por %p53, %p54
      %p56 = scmp.ne.s32.totalorder %s48, %s51
      %p57 = scmp.eq.s32.totalorder %s17, 0
      %p58 = por %p56, %p57
      %p59 = scmp.ne.s32.totalorder %s48, %s51
      %p60 = scmp.eq.s32.totalorder %s22, 1
      %p61 = por %p59, %p60
      %p62 = scmp.ne.s32.totalorder %s51, %s52
      %p63 = scmp.eq.s32.totalorder %s22, 0
      %p64 = por %p62, %p63
      %p65 = scmp.ne.s32.totalorder %s51, %s52
      %p66 = scmp.eq.s32.totalorder %s23, 1
      %p67 = por %p65, %p66
      %p69 = scmp.ne.s32.totalorder %s52, %s68
      %p70 = scmp.eq.s32.totalorder %s23, 0
      %p71 = por %p69, %p70
      %s72 = ssub.s32 %s26, %s35
      %s73 = ssub.s32 %s25, %s39
      %s74 = sor.u32 %s72, %s73
      %p75 = scmp.eq.s32.totalorder %s74, 0
      %s77 = sadd.s32 %s76, 1
      %s78 = scalar_select %p75, %s76, %s77
      %p81 = pneg %p75
      %p82 = scmp.eq.s32.totalorder %s17, 1
      %p83 = por %p81, %p82
      %p84 = scmp.ne.s32.totalorder %s76, %s79
      %p85 = scmp.eq.s32.totalorder %s17, 0
      %p86 = por %p84, %p85
      %p87 = scmp.ne.s32.totalorder %s76, %s79
      %p88 = scmp.eq.s32.totalorder %s22, 1
      %p89 = por %p87, %p88
      %p90 = scmp.ne.s32.totalorder %s79, %s80
      %p91 = scmp.eq.s32.totalorder %s22, 0
      %p92 = por %p90, %p91
      %p93 = scmp.ne.s32.totalorder %s79, %s80
      %p94 = scmp.eq.s32.totalorder %s23, 1
      %p95 = por %p93, %p94
      %p97 = scmp.ne.s32.totalorder %s80, %s96
      %p98 = scmp.eq.s32.totalorder %s23, 0
      %p99 = por %p97, %p98
      %s100 = ssub.s32 %s24, %s43
      %p101 = scmp.eq.s32.totalorder %s100, 0
      %s103 = sadd.s32 %s102, 1
      %s104 = scalar_select %p101, %s102, %s103
      %p107 = pneg %p101
      %p108 = scmp.eq.s32.totalorder %s17, 1
      %p109 = por %p107, %p108
      %p110 = scmp.ne.s32.totalorder %s102, %s105
      %p111 = scmp.eq.s32.totalorder %s17, 0
      %p112 = por %p110, %p111
      %p113 = scmp.ne.s32.totalorder %s102, %s105
      %p114 = scmp.eq.s32.totalorder %s22, 1
      %p115 = por %p113, %p114
      %p116 = scmp.ne.s32.totalorder %s105, %s106
      %p117 = scmp.eq.s32.totalorder %s22, 0
      %p118 = por %p116, %p117
      %p119 = scmp.ne.s32.totalorder %s105, %s106
      %p120 = scmp.eq.s32.totalorder %s23, 1
      %p121 = por %p119, %p120
      %p123 = scmp.ne.s32.totalorder %s106, %s122
      %p124 = scmp.eq.s32.totalorder %s23, 0
      %p125 = por %p123, %p124
      %s126 = ssub.s32 %s25, %s39
      %p127 = scmp.eq.s32.totalorder %s126, 0
      %s129 = sadd.s32 %s128, 1
      %s130 = scalar_select %p127, %s128, %s129
      %p133 = pneg %p127
      %p134 = scmp.eq.s32.totalorder %s17, 1
      %p135 = por %p133, %p134
      %p136 = scmp.ne.s32.totalorder %s128, %s131
      %p137 = scmp.eq.s32.totalorder %s17, 0
      %p138 = por %p136, %p137
      %p139 = scmp.ne.s32.totalorder %s128, %s131
      %p140 = scmp.eq.s32.totalorder %s22, 1
      %p141 = por %p139, %p140
      %p142 = scmp.ne.s32.totalorder %s131, %s132
      %p143 = scmp.eq.s32.totalorder %s22, 0
      %p144 = por %p142, %p143
      %p145 = scmp.ne.s32.totalorder %s131, %s132
      %p146 = scmp.eq.s32.totalorder %s23, 1
      %p147 = por %p145, %p146
      %p149 = scmp.ne.s32.totalorder %s132, %s148
      %p150 = scmp.eq.s32.totalorder %s23, 0
      %p151 = por %p149, %p150
      %s152 = ssub.s32 %s24, %s43
      %s153 = ssub.s32 %s25, %s39
      %s154 = sor.u32 %s152, %s153
      %p155 = scmp.eq.s32.totalorder %s154, 0
      %s157 = sadd.s32 %s156, 1
      %s158 = scalar_select %p155, %s156, %s157
      %p161 = pneg %p155
      %p162 = scmp.eq.s32.totalorder %s17, 1
      %p163 = por %p161, %p162
      %p164 = scmp.ne.s32.totalorder %s156, %s159
      %p165 = scmp.eq.s32.totalorder %s17, 0
      %p166 = por %p164, %p165
      %p167 = scmp.ne.s32.totalorder %s156, %s159
      %p168 = scmp.eq.s32.totalorder %s22, 1
      %p169 = por %p167, %p168
      %p170 = scmp.ne.s32.totalorder %s159, %s160
      %p171 = scmp.eq.s32.totalorder %s22, 0
      %p172 = por %p170, %p171
      %p173 = scmp.ne.s32.totalorder %s159, %s160
      %p174 = scmp.eq.s32.totalorder %s23, 1
      %p175 = por %p173, %p174
      %p177 = scmp.ne.s32.totalorder %s160, %s176
      %p178 = scmp.eq.s32.totalorder %s23, 0
      %p179 = por %p177, %p178
      %p180 = scmp.le.s32.totalorder 1, %s17
      %p181 = scmp.lt.s32.totalorder %s17, 3
      %p182 = pnand %p180, %p181
      %p183 = pneg %p182
      // Predicated region
      $region9: #{tpu_custom_call.1} parent=5 // pred_check
        _
      $region10: #{tpu_custom_call.1} parent=5 // pred_check_branch
        %185 = sbr.rel (%p182) target = $region12
      $region11: #{tpu_custom_call.1} parent=5 // pred_region
        %s186 = ssub.s32 %s17, 1
        // Predicated region
        $region13: #{tpu_custom_call.1} parent=11 // pred_check
          %p187 = pneg %p92
        $region14: #{tpu_custom_call.1} parent=11 // pred_check_branch
          %189 = sbr.rel (%p187) target = $region16
        $region15: #{tpu_custom_call.1} parent=11 // pred_region
          %s190 = smul.u32 16, %s29
          %s192 = ssub.s32 2048, 2048
          %193 = vsyncadd [#allocation7], %s192
          %s194 = sadd.s32 %s28, %s190
          %s195 = smul.addr %s194, 128
          %s196 = scalar_lea.hbm %s1, %s195
          %s197 = sshll.u32 [#allocation6], 4
          %s198 = int_to_ptr.vmem [resolvable:$true] %s197
          %203 = dma.hbm_to_vmem [thread:$0]  %s196, 2048, %s198, [#allocation7], 128, 128, 8
        $region16: #{tpu_custom_call.1} parent=11 // pred_fallthru
          _
        // Predicated region
        $region17: #{tpu_custom_call.1} parent=11 // pred_check
          %p204 = pneg %p144
        $region18: #{tpu_custom_call.1} parent=11 // pred_check_branch
          %206 = sbr.rel (%p204) target = $region20
        $region19: #{tpu_custom_call.1} parent=11 // pred_region
          %p207 = scmp.lt.s32.totalorder %s28, 0
          %s208 = scalar_select %p207, %s28, 0
          %s209 = scalar_lea.vmem %s3, %s208
        $region20: #{tpu_custom_call.1} parent=11 // pred_fallthru
          _
      $region12: #{tpu_custom_call.1} parent=5 // pred_fallthru
        _
      %p210 = scmp.lt.s32.totalorder %s17, 2
      // Predicated region
      $region21: #{tpu_custom_call.1} parent=5 // pred_check
        %p211 = pneg %p210
      $region22: #{tpu_custom_call.1} parent=5 // pred_check_branch
        %213 = sbr.rel (%p211) target = $region24
      $region23: #{tpu_custom_call.1} parent=5 // pred_region
        // Predicated region
        $region25: #{tpu_custom_call.1} parent=23 // pred_check
          %p214 = pneg %p58
        $region26: #{tpu_custom_call.1} parent=23 // pred_check_branch
          %216 = sbr.rel (%p214) target = $region28
        $region27: #{tpu_custom_call.1} parent=23 // pred_region
          %s217 = sand.u32 %s17, 1
          %s218 = scalar_lea.sflag [#allocation4], %s217
          %s219 = sand.u32 %s48, 1
          %s220 = smul.addr %s219, 128
          %s221 = scalar_lea.vmem [#allocation3], %s220
          %s223 = ssub.s32 2048, 2048
          %224 = vsyncadd %s218, %s223
          %s225 = smul.addr %s24, 16
          %s226 = sadd.s32 %s26, %s225
          %s227 = smul.addr %s226, 128
          %s228 = scalar_lea.hbm %s0, %s227
          %s229 = sshll.u32 %s221, 4
          %s230 = int_to_ptr.vmem [resolvable:$true] %s229
          %235 = dma.hbm_to_vmem [thread:$0]  %s228, 2048, %s230, %s218, 128, 128, 8
        $region28: #{tpu_custom_call.1} parent=23 // pred_fallthru
          _
        // Predicated region
        $region29: #{tpu_custom_call.1} parent=23 // pred_check
          %p236 = pneg %p112
        $region30: #{tpu_custom_call.1} parent=23 // pred_check_branch
          %238 = sbr.rel (%p236) target = $region32
        $region31: #{tpu_custom_call.1} parent=23 // pred_region
          %s239 = sand.u32 %s17, 1
          %s240 = scalar_lea.sflag [#allocation4], %s239
          %s241 = sand.u32 %s102, 1
          %s242 = smul.addr %s241, 128
          %s243 = scalar_lea.vmem [#allocation8], %s242
          %s245 = ssub.s32 2048, 2048
          %246 = vsyncadd %s240, %s245
          %s247 = smul.addr %s24, 16
          %s248 = smul.addr %s247, 128
          %s249 = scalar_lea.hbm %s2, %s248
          %s250 = sshll.u32 %s243, 4
          %s251 = int_to_ptr.vmem [resolvable:$true] %s250
          %256 = dma.hbm_to_vmem [thread:$0]  %s249, 2048, %s251, %s240, 128, 128, 8
        $region32: #{tpu_custom_call.1} parent=23 // pred_fallthru
          _
      $region24: #{tpu_custom_call.1} parent=5 // pred_fallthru
        _
      %p257 = scmp.le.s32.totalorder 1, %s17
      %p258 = scmp.lt.s32.totalorder %s17, 3
      %p259 = pnand %p257, %p258
      %p260 = pneg %p259
      // Predicated region
      $region33: #{tpu_custom_call.1} parent=5 // pred_check
        _
      $region34: #{tpu_custom_call.1} parent=5 // pred_check_branch
        %262 = sbr.rel (%p259) target = $region36
      $region35: #{tpu_custom_call.1} parent=5 // pred_region
        %s263 = ssub.s32 %s17, 1
        %s264 = sand.u32 %s22, 1
        %s265 = scalar_lea.sflag [#allocation4], %s264
        %s266 = sand.u32 %s51, 1
        %s267 = smul.addr %s266, 128
        %s268 = scalar_lea.vmem [#allocation3], %s267
        // Predicated region
        $region37: #{tpu_custom_call.1} parent=35 // pred_check
          %p269 = pneg %p64
        $region38: #{tpu_custom_call.1} parent=35 // pred_check_branch
          %271 = sbr.rel (%p269) target = $region40
        $region39: #{tpu_custom_call.1} parent=35 // pred_region
          %272 = dma.done %s265, 2048
        $region40: #{tpu_custom_call.1} parent=35 // pred_fallthru
          _
        // Predicated region
        $region41: #{tpu_custom_call.1} parent=35 // pred_check
          %p273 = pneg %p92
        $region42: #{tpu_custom_call.1} parent=35 // pred_check_branch
          %275 = sbr.rel (%p273) target = $region44
        $region43: #{tpu_custom_call.1} parent=35 // pred_region
          %276 = dma.done [#allocation7], 2048
        $region44: #{tpu_custom_call.1} parent=35 // pred_fallthru
          _
        %s277 = sand.u32 %s22, 1
        %s278 = scalar_lea.sflag [#allocation4], %s277
        %s279 = sand.u32 %s105, 1
        %s280 = smul.addr %s279, 128
        %s281 = scalar_lea.vmem [#allocation8], %s280
        // Predicated region
        $region45: #{tpu_custom_call.1} parent=35 // pred_check
          %p282 = pneg %p118
        $region46: #{tpu_custom_call.1} parent=35 // pred_check_branch
          %284 = sbr.rel (%p282) target = $region48
        $region47: #{tpu_custom_call.1} parent=35 // pred_region
          %285 = dma.done %s278, 2048
        $region48: #{tpu_custom_call.1} parent=35 // pred_fallthru
          _
        %s286 = sand.u32 %s22, 1
        %s287 = scalar_lea.sflag [#allocation4], %s286
        %s288 = sand.u32 %s51, 1
        %s289 = smul.addr %s288, 128
        %s290 = scalar_lea.vmem [#allocation3], %s289
        %p291 = pneg %p64
        %p292 = pneg %p61
        %p293 = pneg %p92
        %p294 = pneg %p89
        %s295 = sand.u32 %s22, 1
        %s296 = scalar_lea.sflag [#allocation4], %s295
        %s297 = sand.u32 %s105, 1
        %s298 = smul.addr %s297, 128
        %s299 = scalar_lea.vmem [#allocation8], %s298
        %p300 = pneg %p118
        %p301 = pneg %p115
        %p302 = scmp.lt.s32.totalorder %s28, 0
        %s303 = scalar_select %p302, %s28, 0
        %s304 = scalar_lea.vmem %s3, %s303
        %p305 = pneg %p144
        %p306 = pneg %p141
        %p307 = pneg %p172
        %p308 = pneg %p169
        %s309 = sand.u32 %s159, 1
        %s310 = scalar_lea.sflag [#allocation5], %s309
        %s311 = sand.u32 %s159, 1
        %s312 = smul.addr %s311, 128
        %s313 = scalar_lea.vmem [#allocation9], %s312
        %s314 = smul.u32 16, %s29
        %p315 = scmp.lt.s32.totalorder %s28, 0
        %s316 = scalar_select %p315, %s28, 0
        %s317 = scalar_lea.vmem %s3, %s316
        %p318 = scmp.eq.s32.totalorder %s29, 0
        // Predicated region
        $region49: #{tpu_custom_call.1} parent=35 // pred_check
          %p319 = pneg %p318
        $region50: #{tpu_custom_call.1} parent=35 // pred_check_branch
          %321 = sbr.rel (%p319) target = $region52
        $region51: #{tpu_custom_call.1} parent=35 // pred_region
          %322 = vst [vmem:[#allocation2] sm:$0xff] 0.0
          %323 = vst [vmem:[#allocation2 + $0x8] sm:$0xff] 0.0
          %324 = vst [vmem:[#allocation2 + $0x10] sm:$0xff] 0.0
          %325 = vst [vmem:[#allocation2 + $0x18] sm:$0xff] 0.0
          %326 = vst [vmem:[#allocation2 + $0x20] sm:$0xff] 0.0
          %327 = vst [vmem:[#allocation2 + $0x28] sm:$0xff] 0.0
          %328 = vst [vmem:[#allocation2 + $0x30] sm:$0xff] 0.0
          %329 = vst [vmem:[#allocation2 + $0x38] sm:$0xff] 0.0
          %330 = vst [vmem:[#allocation2 + $0x40] sm:$0xff] 0.0
          %331 = vst [vmem:[#allocation2 + $0x48] sm:$0xff] 0.0
          %332 = vst [vmem:[#allocation2 + $0x50] sm:$0xff] 0.0
          %333 = vst [vmem:[#allocation2 + $0x58] sm:$0xff] 0.0
          %334 = vst [vmem:[#allocation2 + $0x60] sm:$0xff] 0.0
          %335 = vst [vmem:[#allocation2 + $0x68] sm:$0xff] 0.0
          %336 = vst [vmem:[#allocation2 + $0x70] sm:$0xff] 0.0
          %337 = vst [vmem:[#allocation2 + $0x78] sm:$0xff] 0.0
        $region52: #{tpu_custom_call.1} parent=35 // pred_fallthru
          _
        %v338 = vld [vmem:[#allocation2] sm:$0xff]
        %v339 = vld [vmem:[#allocation2 + $0x8] sm:$0xff]
        %v340 = vld [vmem:[#allocation2 + $0x10] sm:$0xff]
        %v341 = vld [vmem:[#allocation2 + $0x18] sm:$0xff]
        %v342 = vld [vmem:[#allocation2 + $0x20] sm:$0xff]
        %v343 = vld [vmem:[#allocation2 + $0x28] sm:$0xff]
        %v344 = vld [vmem:[#allocation2 + $0x30] sm:$0xff]
        %v345 = vld [vmem:[#allocation2 + $0x38] sm:$0xff]
        %v346 = vld [vmem:[#allocation2 + $0x40] sm:$0xff]
        %v347 = vld [vmem:[#allocation2 + $0x48] sm:$0xff]
        %v348 = vld [vmem:[#allocation2 + $0x50] sm:$0xff]
        %v349 = vld [vmem:[#allocation2 + $0x58] sm:$0xff]
        %v350 = vld [vmem:[#allocation2 + $0x60] sm:$0xff]
        %v351 = vld [vmem:[#allocation2 + $0x68] sm:$0xff]
        %v352 = vld [vmem:[#allocation2 + $0x70] sm:$0xff]
        %v353 = vld [vmem:[#allocation2 + $0x78] sm:$0xff]
        %v354 = vld [vmem:[%s268] sm:$0xff]
        %v355 = vld [vmem:[%s268 + $0x8] sm:$0xff]
        %v356 = vld [vmem:[%s268 + $0x10] sm:$0xff]
        %v357 = vld [vmem:[%s268 + $0x18] sm:$0xff]
        %v358 = vld [vmem:[%s268 + $0x20] sm:$0xff]
        %v359 = vld [vmem:[%s268 + $0x28] sm:$0xff]
        %v360 = vld [vmem:[%s268 + $0x30] sm:$0xff]
        %v361 = vld [vmem:[%s268 + $0x38] sm:$0xff]
        %v362 = vld [vmem:[%s268 + $0x40] sm:$0xff]
        %v363 = vld [vmem:[%s268 + $0x48] sm:$0xff]
        %v364 = vld [vmem:[%s268 + $0x50] sm:$0xff]
        %v365 = vld [vmem:[%s268 + $0x58] sm:$0xff]
        %v366 = vld [vmem:[%s268 + $0x60] sm:$0xff]
        %v367 = vld [vmem:[%s268 + $0x68] sm:$0xff]
        %v368 = vld [vmem:[%s268 + $0x70] sm:$0xff]
        %v369 = vld [vmem:[%s268 + $0x78] sm:$0xff]
        %v370 = vld [vmem:[#allocation6] sm:$0xff]
        %v371 = vld [vmem:[#allocation6 + $0x8] sm:$0xff]
        %v372 = vld [vmem:[#allocation6 + $0x10] sm:$0xff]
        %v373 = vld [vmem:[#allocation6 + $0x18] sm:$0xff]
        %v374 = vld [vmem:[#allocation6 + $0x20] sm:$0xff]
        %v375 = vld [vmem:[#allocation6 + $0x28] sm:$0xff]
        %v376 = vld [vmem:[#allocation6 + $0x30] sm:$0xff]
        %v377 = vld [vmem:[#allocation6 + $0x38] sm:$0xff]
        %v378 = vld [vmem:[#allocation6 + $0x40] sm:$0xff]
        %v379 = vld [vmem:[#allocation6 + $0x48] sm:$0xff]
        %v380 = vld [vmem:[#allocation6 + $0x50] sm:$0xff]
        %v381 = vld [vmem:[#allocation6 + $0x58] sm:$0xff]
        %v382 = vld [vmem:[#allocation6 + $0x60] sm:$0xff]
        %v383 = vld [vmem:[#allocation6 + $0x68] sm:$0xff]
        %v384 = vld [vmem:[#allocation6 + $0x70] sm:$0xff]
        %v385 = vld [vmem:[#allocation6 + $0x78] sm:$0xff]
        %386 = vmatprep.subr.mxu0 0.0
        %387 = vmatpush1.msra.mxu0 %v385
        %388 = vmatprep.subr.mxu0 0.0
        %389 = vmatpush1.msra.mxu0 %v384
        %390 = vmatprep.subr.mxu0 0.0
        %391 = vmatpush1.msra.mxu0 %v383
        %392 = vmatprep.subr.mxu0 0.0
        %393 = vmatpush1.msra.mxu0 %v382
        %394 = vmatprep.subr.mxu0 0.0
        %395 = vmatpush1.msra.mxu0 %v381
        %396 = vmatprep.subr.mxu0 0.0
        %397 = vmatpush1.msra.mxu0 %v380
        %398 = vmatprep.subr.mxu0 0.0
        %399 = vmatpush1.msra.mxu0 %v379
        %400 = vmatprep.subr.mxu0 0.0
        %401 = vmatpush1.msra.mxu0 %v378
        %402 = vmatprep.subr.mxu0 0.0
        %403 = vmatpush1.msra.mxu0 %v377
        %404 = vmatprep.subr.mxu0 0.0
        %405 = vmatpush1.msra.mxu0 %v376
        %406 = vmatprep.subr.mxu0 0.0
        %407 = vmatpush1.msra.mxu0 %v375
        %408 = vmatprep.subr.mxu0 0.0
        %409 = vmatpush1.msra.mxu0 %v374
        %410 = vmatprep.subr.mxu0 0.0
        %411 = vmatpush1.msra.mxu0 %v373
        %412 = vmatprep.subr.mxu0 0.0
        %413 = vmatpush1.msra.mxu0 %v372
        %414 = vmatprep.subr.mxu0 0.0
        %415 = vmatpush1.msra.mxu0 %v371
        %416 = vmatprep.subr.mxu0 0.0
        %417 = vmatpush1.msra.mxu0 %v370
        %418 = vmatprep.subr.mxu0 0.0
        %419 = vmatpush2.msra.mxu0 0.0
        %420 = vmatprep.subr.mxu0 0.0
        %421 = vmatpush2.msra.mxu0 0.0
        %422 = vmatprep.subr.mxu0 0.0
        %423 = vmatpush2.msra.mxu0 0.0
        %424 = vmatprep.subr.mxu0 0.0
        %425 = vmatpush2.msra.mxu0 0.0
        %426 = vmatprep.subr.mxu0 0.0
        %427 = vmatpush2.msra.mxu0 0.0
        %428 = vmatprep.subr.mxu0 0.0
        %429 = vmatpush2.msra.mxu0 0.0
        %430 = vmatprep.subr.mxu0 0.0
        %431 = vmatpush2.msra.mxu0 0.0
        %432 = vmatprep.subr.mxu0 0.0
        %433 = vmatpush2.msra.mxu0 0.0
        %434 = vmatprep.subr.mxu0 0.0
        %435 = vmatpush2.msra.mxu0 0.0
        %436 = vmatprep.subr.mxu0 0.0
        %437 = vmatpush2.msra.mxu0 0.0
        %438 = vmatprep.subr.mxu0 0.0
        %439 = vmatpush2.msra.mxu0 0.0
        %440 = vmatprep.subr.mxu0 0.0
        %441 = vmatpush2.msra.mxu0 0.0
        %442 = vmatprep.subr.mxu0 0.0
        %443 = vmatpush2.msra.mxu0 0.0
        %444 = vmatprep.subr.mxu0 0.0
        %445 = vmatpush2.msra.mxu0 0.0
        %446 = vmatprep.subr.mxu0 0.0
        %447 = vmatpush2.msra.mxu0 0.0
        %448 = vmatprep.subr.mxu0 0.0
        %449 = vmatpush2.msra.mxu0 0.0
        %450 = vmatprep.mubr.f32.mxu0 0.0
        %451 = vmatmul.mubr.f32.gmra.mxu0 %v354
        %v452 = vpop.f32.mrf.mxu0
        %v453 = vadd.f32 0.0, %v452
        %v454 = vpop.f32.mrf.mxu0
        %455 = vmatprep.mubr.f32.mxu0 0.0
        %456 = vmatmul.mubr.f32.gmra.mxu0 %v355
        %v457 = vpop.f32.mrf.mxu0
        %v458 = vadd.f32 0.0, %v457
        %v459 = vpop.f32.mrf.mxu0
        %460 = vmatprep.mubr.f32.mxu0 0.0
        %461 = vmatmul.mubr.f32.gmra.mxu0 %v356
        %v462 = vpop.f32.mrf.mxu0
        %v463 = vadd.f32 0.0, %v462
        %v464 = vpop.f32.mrf.mxu0
        %465 = vmatprep.mubr.f32.mxu0 0.0
        %466 = vmatmul.mubr.f32.gmra.mxu0 %v357
        %v467 = vpop.f32.mrf.mxu0
        %v468 = vadd.f32 0.0, %v467
        %v469 = vpop.f32.mrf.mxu0
        %470 = vmatprep.mubr.f32.mxu0 0.0
        %471 = vmatmul.mubr.f32.gmra.mxu0 %v358
        %v472 = vpop.f32.mrf.mxu0
        %v473 = vadd.f32 0.0, %v472
        %v474 = vpop.f32.mrf.mxu0
        %475 = vmatprep.mubr.f32.mxu0 0.0
        %476 = vmatmul.mubr.f32.gmra.mxu0 %v359
        %v477 = vpop.f32.mrf.mxu0
        %v478 = vadd.f32 0.0, %v477
        %v479 = vpop.f32.mrf.mxu0
        %480 = vmatprep.mubr.f32.mxu0 0.0
        %481 = vmatmul.mubr.f32.gmra.mxu0 %v360
        %v482 = vpop.f32.mrf.mxu0
        %v483 = vadd.f32 0.0, %v482
        %v484 = vpop.f32.mrf.mxu0
        %485 = vmatprep.mubr.f32.mxu0 0.0
        %486 = vmatmul.mubr.f32.gmra.mxu0 %v361
        %v487 = vpop.f32.mrf.mxu0
        %v488 = vadd.f32 0.0, %v487
        %v489 = vpop.f32.mrf.mxu0
        %490 = vmatprep.mubr.f32.mxu0 0.0
        %491 = vmatmul.mubr.f32.gmra.mxu0 %v362
        %v492 = vpop.f32.mrf.mxu0
        %v493 = vadd.f32 0.0, %v492
        %v494 = vpop.f32.mrf.mxu0
        %495 = vmatprep.mubr.f32.mxu0 0.0
        %496 = vmatmul.mubr.f32.gmra.mxu0 %v363
        %v497 = vpop.f32.mrf.mxu0
        %v498 = vadd.f32 0.0, %v497
        %v499 = vpop.f32.mrf.mxu0
        %500 = vmatprep.mubr.f32.mxu0 0.0
        %501 = vmatmul.mubr.f32.gmra.mxu0 %v364
        %v502 = vpop.f32.mrf.mxu0
        %v503 = vadd.f32 0.0, %v502
        %v504 = vpop.f32.mrf.mxu0
        %505 = vmatprep.mubr.f32.mxu0 0.0
        %506 = vmatmul.mubr.f32.gmra.mxu0 %v365
        %v507 = vpop.f32.mrf.mxu0
        %v508 = vadd.f32 0.0, %v507
        %v509 = vpop.f32.mrf.mxu0
        %510 = vmatprep.mubr.f32.mxu0 0.0
        %511 = vmatmul.mubr.f32.gmra.mxu0 %v366
        %v512 = vpop.f32.mrf.mxu0
        %v513 = vadd.f32 0.0, %v512
        %v514 = vpop.f32.mrf.mxu0
        %515 = vmatprep.mubr.f32.mxu0 0.0
        %516 = vmatmul.mubr.f32.gmra.mxu0 %v367
        %v517 = vpop.f32.mrf.mxu0
        %v518 = vadd.f32 0.0, %v517
        %v519 = vpop.f32.mrf.mxu0
        %520 = vmatprep.mubr.f32.mxu0 0.0
        %521 = vmatmul.mubr.f32.gmra.mxu0 %v368
        %v522 = vpop.f32.mrf.mxu0
        %v523 = vadd.f32 0.0, %v522
        %v524 = vpop.f32.mrf.mxu0
        %525 = vmatprep.mubr.f32.mxu0 0.0
        %526 = vmatmul.mubr.f32.gmra.mxu0 %v369
        %v527 = vpop.f32.mrf.mxu0
        %v528 = vadd.f32 0.0, %v527
        %v529 = vpop.f32.mrf.mxu0
        %530 = vdwg.mxu0
        %v531 = vadd.f32 %v338, %v453
        %v532 = vadd.f32 %v339, %v458
        %v533 = vadd.f32 %v340, %v463
        %v534 = vadd.f32 %v341, %v468
        %v535 = vadd.f32 %v342, %v473
        %v536 = vadd.f32 %v343, %v478
        %v537 = vadd.f32 %v344, %v483
        %v538 = vadd.f32 %v345, %v488
        %v539 = vadd.f32 %v346, %v493
        %v540 = vadd.f32 %v347, %v498
        %v541 = vadd.f32 %v348, %v503
        %v542 = vadd.f32 %v349, %v508
        %v543 = vadd.f32 %v350, %v513
        %v544 = vadd.f32 %v351, %v518
        %v545 = vadd.f32 %v352, %v523
        %v546 = vadd.f32 %v353, %v528
        %547 = vst [vmem:[#allocation2] sm:$0xff] %v531
        %548 = vst [vmem:[#allocation2 + $0x8] sm:$0xff] %v532
        %549 = vst [vmem:[#allocation2 + $0x10] sm:$0xff] %v533
        %550 = vst [vmem:[#allocation2 + $0x18] sm:$0xff] %v534
        %551 = vst [vmem:[#allocation2 + $0x20] sm:$0xff] %v535
        %552 = vst [vmem:[#allocation2 + $0x28] sm:$0xff] %v536
        %553 = vst [vmem:[#allocation2 + $0x30] sm:$0xff] %v537
        %554 = vst [vmem:[#allocation2 + $0x38] sm:$0xff] %v538
        %555 = vst [vmem:[#allocation2 + $0x40] sm:$0xff] %v539
        %556 = vst [vmem:[#allocation2 + $0x48] sm:$0xff] %v540
        %557 = vst [vmem:[#allocation2 + $0x50] sm:$0xff] %v541
        %558 = vst [vmem:[#allocation2 + $0x58] sm:$0xff] %v542
        %559 = vst [vmem:[#allocation2 + $0x60] sm:$0xff] %v543
        %560 = vst [vmem:[#allocation2 + $0x68] sm:$0xff] %v544
        %561 = vst [vmem:[#allocation2 + $0x70] sm:$0xff] %v545
        %562 = vst [vmem:[#allocation2 + $0x78] sm:$0xff] %v546
        // Predicated region
        $region53: #{tpu_custom_call.1} parent=35 // pred_check
          %p563 = pneg %p318
        $region54: #{tpu_custom_call.1} parent=35 // pred_check_branch
          %565 = sbr.rel (%p563) target = $region56
        $region55: #{tpu_custom_call.1} parent=35 // pred_region
          %v566 = vld [vmem:[%s281] sm:$0xff]
          %v567 = vld [vmem:[%s281 + $0x8] sm:$0xff]
          %v568 = vld [vmem:[%s281 + $0x10] sm:$0xff]
          %v569 = vld [vmem:[%s281 + $0x18] sm:$0xff]
          %v570 = vld [vmem:[%s281 + $0x20] sm:$0xff]
          %v571 = vld [vmem:[%s281 + $0x28] sm:$0xff]
          %v572 = vld [vmem:[%s281 + $0x30] sm:$0xff]
          %v573 = vld [vmem:[%s281 + $0x38] sm:$0xff]
          %v574 = vld [vmem:[%s281 + $0x40] sm:$0xff]
          %v575 = vld [vmem:[%s281 + $0x48] sm:$0xff]
          %v576 = vld [vmem:[%s281 + $0x50] sm:$0xff]
          %v577 = vld [vmem:[%s281 + $0x58] sm:$0xff]
          %v578 = vld [vmem:[%s281 + $0x60] sm:$0xff]
          %v579 = vld [vmem:[%s281 + $0x68] sm:$0xff]
          %v580 = vld [vmem:[%s281 + $0x70] sm:$0xff]
          %v581 = vld [vmem:[%s281 + $0x78] sm:$0xff]
          %v582 = vld [vmem:[#allocation2] sm:$0xff]
          %v583 = vld [vmem:[#allocation2 + $0x8] sm:$0xff]
          %v584 = vld [vmem:[#allocation2 + $0x10] sm:$0xff]
          %v585 = vld [vmem:[#allocation2 + $0x18] sm:$0xff]
          %v586 = vld [vmem:[#allocation2 + $0x20] sm:$0xff]
          %v587 = vld [vmem:[#allocation2 + $0x28] sm:$0xff]
          %v588 = vld [vmem:[#allocation2 + $0x30] sm:$0xff]
          %v589 = vld [vmem:[#allocation2 + $0x38] sm:$0xff]
          %v590 = vld [vmem:[#allocation2 + $0x40] sm:$0xff]
          %v591 = vld [vmem:[#allocation2 + $0x48] sm:$0xff]
          %v592 = vld [vmem:[#allocation2 + $0x50] sm:$0xff]
          %v593 = vld [vmem:[#allocation2 + $0x58] sm:$0xff]
          %v594 = vld [vmem:[#allocation2 + $0x60] sm:$0xff]
          %v595 = vld [vmem:[#allocation2 + $0x68] sm:$0xff]
          %v596 = vld [vmem:[#allocation2 + $0x70] sm:$0xff]
          %v597 = vld [vmem:[#allocation2 + $0x78] sm:$0xff]
          %v598 = vld [vmem:[%s317] sm:$0x1]
          %v600 = vlaneseq
          %v601 = vshrl.u32 %v600, 7
          %v602 = vsub.s32 0, %v601
          %v603 = vrot.slane %v598, %v602
          %605 = vmatprep.subr.mxu0 0.0
          %606 = vmatpush1.msra.mxu0 %v597
          %607 = vmatprep.subr.mxu0 0.0
          %608 = vmatpush1.msra.mxu0 %v596
          %609 = vmatprep.subr.mxu0 0.0
          %610 = vmatpush1.msra.mxu0 %v595
          %611 = vmatprep.subr.mxu0 0.0
          %612 = vmatpush1.msra.mxu0 %v594
          %613 = vmatprep.subr.mxu0 0.0
          %614 = vmatpush1.msra.mxu0 %v593
          %615 = vmatprep.subr.mxu0 0.0
          %616 = vmatpush1.msra.mxu0 %v592
          %617 = vmatprep.subr.mxu0 0.0
          %618 = vmatpush1.msra.mxu0 %v591
          %619 = vmatprep.subr.mxu0 0.0
          %620 = vmatpush1.msra.mxu0 %v590
          %621 = vmatprep.subr.mxu0 0.0
          %622 = vmatpush1.msra.mxu0 %v589
          %623 = vmatprep.subr.mxu0 0.0
          %624 = vmatpush1.msra.mxu0 %v588
          %625 = vmatprep.subr.mxu0 0.0
          %626 = vmatpush1.msra.mxu0 %v587
          %627 = vmatprep.subr.mxu0 0.0
          %628 = vmatpush1.msra.mxu0 %v586
          %629 = vmatprep.subr.mxu0 0.0
          %630 = vmatpush1.msra.mxu0 %v585
          %631 = vmatprep.subr.mxu0 0.0
          %632 = vmatpush1.msra.mxu0 %v584
          %633 = vmatprep.subr.mxu0 0.0
          %634 = vmatpush1.msra.mxu0 %v583
          %635 = vmatprep.subr.mxu0 0.0
          %636 = vmatpush1.msra.mxu0 %v582
          %637 = vmatprep.subr.mxu0 0.0
          %638 = vmatpush2.msra.mxu0 0.0
          %639 = vmatprep.subr.mxu0 0.0
          %640 = vmatpush2.msra.mxu0 0.0
          %641 = vmatprep.subr.mxu0 0.0
          %642 = vmatpush2.msra.mxu0 0.0
          %643 = vmatprep.subr.mxu0 0.0
          %644 = vmatpush2.msra.mxu0 0.0
          %645 = vmatprep.subr.mxu0 0.0
          %646 = vmatpush2.msra.mxu0 0.0
          %647 = vmatprep.subr.mxu0 0.0
          %648 = vmatpush2.msra.mxu0 0.0
          %649 = vmatprep.subr.mxu0 0.0
          %650 = vmatpush2.msra.mxu0 0.0
          %651 = vmatprep.subr.mxu0 0.0
          %652 = vmatpush2.msra.mxu0 0.0
          %653 = vmatprep.subr.mxu0 0.0
          %654 = vmatpush2.msra.mxu0 0.0
          %655 = vmatprep.subr.mxu0 0.0
          %656 = vmatpush2.msra.mxu0 0.0
          %657 = vmatprep.subr.mxu0 0.0
          %658 = vmatpush2.msra.mxu0 0.0
          %659 = vmatprep.subr.mxu0 0.0
          %660 = vmatpush2.msra.mxu0 0.0
          %661 = vmatprep.subr.mxu0 0.0
          %662 = vmatpush2.msra.mxu0 0.0
          %663 = vmatprep.subr.mxu0 0.0
          %664 = vmatpush2.msra.mxu0 0.0
          %665 = vmatprep.subr.mxu0 0.0
          %666 = vmatpush2.msra.mxu0 0.0
          %667 = vmatprep.subr.mxu0 0.0
          %668 = vmatpush2.msra.mxu0 0.0
          %669 = vmatprep.mubr.f32.mxu0 0.0
          %670 = vmatmul.mubr.f32.gmra.mxu0 %v566
          %v671 = vpop.f32.mrf.mxu0
          %v672 = vadd.f32 %v603, %v671
          %v673 = vpop.f32.mrf.mxu0
          %674 = vmatprep.mubr.f32.mxu0 0.0
          %675 = vmatmul.mubr.f32.gmra.mxu0 %v567
          %v676 = vpop.f32.mrf.mxu0
          %v677 = vadd.f32 %v603, %v676
          %v678 = vpop.f32.mrf.mxu0
          %679 = vmatprep.mubr.f32.mxu0 0.0
          %680 = vmatmul.mubr.f32.gmra.mxu0 %v568
          %v681 = vpop.f32.mrf.mxu0
          %v682 = vadd.f32 %v603, %v681
          %v683 = vpop.f32.mrf.mxu0
          %684 = vmatprep.mubr.f32.mxu0 0.0
          %685 = vmatmul.mubr.f32.gmra.mxu0 %v569
          %v686 = vpop.f32.mrf.mxu0
          %v687 = vadd.f32 %v603, %v686
          %v688 = vpop.f32.mrf.mxu0
          %689 = vmatprep.mubr.f32.mxu0 0.0
          %690 = vmatmul.mubr.f32.gmra.mxu0 %v570
          %v691 = vpop.f32.mrf.mxu0
          %v692 = vadd.f32 %v603, %v691
          %v693 = vpop.f32.mrf.mxu0
          %694 = vmatprep.mubr.f32.mxu0 0.0
          %695 = vmatmul.mubr.f32.gmra.mxu0 %v571
          %v696 = vpop.f32.mrf.mxu0
          %v697 = vadd.f32 %v603, %v696
          %v698 = vpop.f32.mrf.mxu0
          %699 = vmatprep.mubr.f32.mxu0 0.0
          %700 = vmatmul.mubr.f32.gmra.mxu0 %v572
          %v701 = vpop.f32.mrf.mxu0
          %v702 = vadd.f32 %v603, %v701
          %v703 = vpop.f32.mrf.mxu0
          %704 = vmatprep.mubr.f32.mxu0 0.0
          %705 = vmatmul.mubr.f32.gmra.mxu0 %v573
          %v706 = vpop.f32.mrf.mxu0
          %v707 = vadd.f32 %v603, %v706
          %v708 = vpop.f32.mrf.mxu0
          %709 = vmatprep.mubr.f32.mxu0 0.0
          %710 = vmatmul.mubr.f32.gmra.mxu0 %v574
          %v711 = vpop.f32.mrf.mxu0
          %v712 = vadd.f32 %v603, %v711
          %v713 = vpop.f32.mrf.mxu0
          %714 = vmatprep.mubr.f32.mxu0 0.0
          %715 = vmatmul.mubr.f32.gmra.mxu0 %v575
          %v716 = vpop.f32.mrf.mxu0
          %v717 = vadd.f32 %v603, %v716
          %v718 = vpop.f32.mrf.mxu0
          %719 = vmatprep.mubr.f32.mxu0 0.0
          %720 = vmatmul.mubr.f32.gmra.mxu0 %v576
          %v721 = vpop.f32.mrf.mxu0
          %v722 = vadd.f32 %v603, %v721
          %v723 = vpop.f32.mrf.mxu0
          %724 = vmatprep.mubr.f32.mxu0 0.0
          %725 = vmatmul.mubr.f32.gmra.mxu0 %v577
          %v726 = vpop.f32.mrf.mxu0
          %v727 = vadd.f32 %v603, %v726
          %v728 = vpop.f32.mrf.mxu0
          %729 = vmatprep.mubr.f32.mxu0 0.0
          %730 = vmatmul.mubr.f32.gmra.mxu0 %v578
          %v731 = vpop.f32.mrf.mxu0
          %v732 = vadd.f32 %v603, %v731
          %v733 = vpop.f32.mrf.mxu0
          %734 = vmatprep.mubr.f32.mxu0 0.0
          %735 = vmatmul.mubr.f32.gmra.mxu0 %v579
          %v736 = vpop.f32.mrf.mxu0
          %v737 = vadd.f32 %v603, %v736
          %v738 = vpop.f32.mrf.mxu0
          %739 = vmatprep.mubr.f32.mxu0 0.0
          %740 = vmatmul.mubr.f32.gmra.mxu0 %v580
          %v741 = vpop.f32.mrf.mxu0
          %v742 = vadd.f32 %v603, %v741
          %v743 = vpop.f32.mrf.mxu0
          %744 = vmatprep.mubr.f32.mxu0 0.0
          %745 = vmatmul.mubr.f32.gmra.mxu0 %v581
          %v746 = vpop.f32.mrf.mxu0
          %v747 = vadd.f32 %v603, %v746
          %v748 = vpop.f32.mrf.mxu0
          %749 = vdwg.mxu0
          %750 = vst [vmem:[%s313] sm:$0xff] %v672
          %751 = vst [vmem:[%s313 + $0x8] sm:$0xff] %v677
          %752 = vst [vmem:[%s313 + $0x10] sm:$0xff] %v682
          %753 = vst [vmem:[%s313 + $0x18] sm:$0xff] %v687
          %754 = vst [vmem:[%s313 + $0x20] sm:$0xff] %v692
          %755 = vst [vmem:[%s313 + $0x28] sm:$0xff] %v697
          %756 = vst [vmem:[%s313 + $0x30] sm:$0xff] %v702
          %757 = vst [vmem:[%s313 + $0x38] sm:$0xff] %v707
          %758 = vst [vmem:[%s313 + $0x40] sm:$0xff] %v712
          %759 = vst [vmem:[%s313 + $0x48] sm:$0xff] %v717
          %760 = vst [vmem:[%s313 + $0x50] sm:$0xff] %v722
          %761 = vst [vmem:[%s313 + $0x58] sm:$0xff] %v727
          %762 = vst [vmem:[%s313 + $0x60] sm:$0xff] %v732
          %763 = vst [vmem:[%s313 + $0x68] sm:$0xff] %v737
          %764 = vst [vmem:[%s313 + $0x70] sm:$0xff] %v742
          %765 = vst [vmem:[%s313 + $0x78] sm:$0xff] %v747
        $region56: #{tpu_custom_call.1} parent=35 // pred_fallthru
          _
        %s766 = sand.u32 %s159, 1
        %s767 = scalar_lea.sflag [#allocation5], %s766
        %s768 = sand.u32 %s159, 1
        %s769 = smul.addr %s768, 128
        %s770 = scalar_lea.vmem [#allocation9], %s769
        // Predicated region
        $region57: #{tpu_custom_call.1} parent=35 // pred_check
          %p771 = pneg %p169
        $region58: #{tpu_custom_call.1} parent=35 // pred_check_branch
          %773 = sbr.rel (%p771) target = $region60
        $region59: #{tpu_custom_call.1} parent=35 // pred_region
          %s775 = ssub.s32 2048, 2048
          %776 = vsyncadd %s767, %s775
          %s777 = smul.addr %s27, 16
          %s778 = sadd.s32 %s28, %s777
          %s779 = smul.addr %s778, 128
          %s780 = scalar_lea.hbm %s4, %s779
          %s781 = sshll.u32 %s770, 4
          %s782 = int_to_ptr.vmem [resolvable:$true] %s781
          %787 = dma.vmem_to_hbm [thread:$0]  %s782, 2048, %s780, %s767, 128, 128, 8
        $region60: #{tpu_custom_call.1} parent=35 // pred_fallthru
          _
      $region36: #{tpu_custom_call.1} parent=5 // pred_fallthru
        _
      %p788 = scmp.le.s32.totalorder 2, %s17
      // Predicated region
      $region61: #{tpu_custom_call.1} parent=5 // pred_check
        %p789 = pneg %p788
      $region62: #{tpu_custom_call.1} parent=5 // pred_check_branch
        %791 = sbr.rel (%p789) target = $region64
      $region63: #{tpu_custom_call.1} parent=5 // pred_region
        %s792 = ssub.s32 %s17, 2
        // Predicated region
        $region65: #{tpu_custom_call.1} parent=63 // pred_check
          %p793 = pneg %p175
        $region66: #{tpu_custom_call.1} parent=63 // pred_check_branch
          %795 = sbr.rel (%p793) target = $region68
        $region67: #{tpu_custom_call.1} parent=63 // pred_region
          %s796 = sand.u32 %s160, 1
          %s797 = scalar_lea.sflag [#allocation5], %s796
          %s798 = sand.u32 %s160, 1
          %s799 = smul.addr %s798, 128
          %s800 = scalar_lea.vmem [#allocation9], %s799
          %801 = dma.done %s797, 2048
        $region68: #{tpu_custom_call.1} parent=63 // pred_fallthru
          _
      $region64: #{tpu_custom_call.1} parent=5 // pred_fallthru
        _
    $region6: #{tpu_custom_call.1} parent=1 // loop_footer
      %s21 = sadd.s32 1, %s17
    $region7: #{tpu_custom_call.1} parent=1 // loop_footer_branch
      %16 = sbr.rel target = $region3
    $region8: #{tpu_custom_call.1} parent=1 // loop_exit
      _
    %802 = vsyncpa [#allocation4], 1
    %s803 = scalar_lea.sflag [#allocation4], 1
    %804 = vsyncpa %s803, 1
    %805 = vsyncpa [#allocation7], 1
    %806 = vsyncpa [#allocation5], 1
    %s807 = scalar_lea.sflag [#allocation5], 1
    %808 = vsyncpa %s807, 1

</llo_original>
